<compile_context>
chip_gen: v6e
topology: v6e:2x2x1
jax: 0.10.0
libtpu: 0.0.40
codegen_flags: <defaults>
</compile_context>

<pallas_src>
import jax
import jax.numpy as jnp
from jax.experimental import pallas as pl
from jax.experimental.pallas import tpu as pltpu

EPS = 1e-5      # PyTorch BatchNorm2d default eps
CPAD = 8        # C_in padded to a sublane multiple
COUT_PAD = 8    # C_out padded to a sublane multiple -> unmasked output stores


def _round_up(x, m):
    return (x + m - 1) // m * m


def _make_kernel(W, KH, KW, P_lanes, inv_cnt):
    def kernel(x_ref, w_ref, gb_ref, mask_ref, out_ref):
        # x_ref:    (CPAD, L_pad)          bf16, lanes = flattened (n, h, w)
        # w_ref:    (COUT_PAD, KH*KW*CPAD) bf16, per-tap (kh,kw) blocks of ci
        # gb_ref:   (COUT_PAD, 2)          f32  [gamma | beta]
        # mask_ref: (1, P_lanes)           f32  1.0 on valid output lanes
        # out_ref:  (COUT_PAD, P_lanes)    f32
        #
        # Conv as 9 accumulated tiny MXU GEMMs on shifted lane-slices of x:
        # for output lane p = n*H*W + h*W + w the tap (kh, kw) reads lane
        # p + kh*W + kw, i.e. x[n, :, h+kh, w+kw].  No patches buffer.
        acc = None
        for kh in range(KH):
            for kw in range(KW):
                off = kh * W + kw
                tap = kh * KW + kw
                xs = x_ref[:, off:off + P_lanes]                # (CPAD, P) bf16
                wt = w_ref[:, tap * CPAD:(tap + 1) * CPAD]      # (COUT_PAD, CPAD)
                part = jnp.dot(wt, xs, preferred_element_type=jnp.float32)
                acc = part if acc is None else acc + part
        y = acc                                                 # (COUT_PAD, P) f32

        # Training-mode BatchNorm: per-channel batch stats (biased variance),
        # f32 lane-direction reductions; invalid lanes masked via precomputed
        # wrapper mask (broadcast over sublanes).
        mask = mask_ref[...]                                    # (1, P) f32
        mean = jnp.sum(y * mask, axis=-1, keepdims=True) * inv_cnt
        d = y - mean
        var = jnp.sum((d * d) * mask, axis=-1, keepdims=True) * inv_cnt

        gamma = gb_ref[:, 0:1]
        beta = gb_ref[:, 1:2]
        scale = gamma * jax.lax.rsqrt(var + EPS)
        out_ref[...] = d * scale + beta

    return kernel


def model2_forward(x, conv_w, conv_b, bn_gamma, bn_beta):
    """x: (N, C_in, H, W) NCHW; conv_w: (C_out, C_in, KH, KW)."""
    N, Cin, H, W = x.shape
    Cout, _, KH, KW = conv_w.shape
    OH, OW = H - KH + 1, W - KW + 1          # stride 1, no padding
    NHW = N * H * W
    K = KH * KW * CPAD

    P_lanes = _round_up(NHW, 128)
    max_off = (KH - 1) * W + (KW - 1)
    L_pad = _round_up(P_lanes + max_off, 128)

    # x -> (CPAD, L_pad) bf16: one fused transpose/reshape/cast/pad pass
    # (channels on sublanes, flattened (n, h, w) on lanes).
    x_kern = jnp.pad(
        jnp.transpose(x, (1, 0, 2, 3)).reshape(Cin, NHW).astype(jnp.bfloat16),
        ((0, CPAD - Cin), (0, L_pad - NHW)))

    # Weights -> (COUT_PAD, KH*KW*CPAD); tap-major (kh, kw) column blocks of
    # ci, zero-padded channel rows/columns.
    w_pad = jnp.pad(conv_w.astype(jnp.float32),
                    ((0, COUT_PAD - Cout), (0, CPAD - Cin), (0, 0), (0, 0)))
    w_kern = jnp.transpose(w_pad, (0, 2, 3, 1)).reshape(COUT_PAD, K)
    w_kern = w_kern.astype(jnp.bfloat16)

    # Conv bias intentionally unused: training-mode BatchNorm cancels it
    # exactly (removed by the batch-mean subtraction, no effect on variance).
    del conv_b
    gamma_p = jnp.pad(bn_gamma.astype(jnp.float32), (0, COUT_PAD - Cout))
    beta_p = jnp.pad(bn_beta.astype(jnp.float32), (0, COUT_PAD - Cout))
    gb = jnp.stack([gamma_p, beta_p], axis=1)                   # (COUT_PAD, 2)

    # Validity mask over flattened (n, h, w) lanes, hoisted out of the kernel
    # (data-independent; avoids the in-kernel iota + div/mod VPU chain).
    pidx = jnp.arange(P_lanes, dtype=jnp.int32)
    valid = ((pidx % W) < OW) & (((pidx // W) % H) < OH) & (pidx < NHW)
    mask = valid.astype(jnp.float32).reshape(1, P_lanes)

    inv_cnt = 1.0 / float(N * OH * OW)
    kernel = _make_kernel(W, KH, KW, P_lanes, inv_cnt)

    cost = pl.CostEstimate(
        flops=2 * COUT_PAD * CPAD * P_lanes * KH * KW + 10 * COUT_PAD * P_lanes,
        transcendentals=COUT_PAD,
        bytes_accessed=(x_kern.size * 2 + w_kern.size * 2 + gb.size * 4
                        + mask.size * 4 + COUT_PAD * P_lanes * 4))

    out_pad = pl.pallas_call(
        kernel,
        out_shape=jax.ShapeDtypeStruct((COUT_PAD, P_lanes), jnp.float32),
        grid=(1,),
        in_specs=[
            pl.BlockSpec((CPAD, L_pad), lambda i: (0, 0)),
            pl.BlockSpec((COUT_PAD, K), lambda i: (0, 0)),
            pl.BlockSpec((COUT_PAD, 2), lambda i: (0, 0)),
            pl.BlockSpec((1, P_lanes), lambda i: (0, 0)),
        ],
        out_specs=pl.BlockSpec((COUT_PAD, P_lanes), lambda i: (0, 0)),
        compiler_params=pltpu.CompilerParams(
            dimension_semantics=("arbitrary",),
            allow_input_fusion=[True, True, True, True]),
        cost_estimate=cost,
    )(x_kern, w_kern, gb, mask)

    # (COUT_PAD, P) -> NCHW: crop padded channels/lanes and invalid spatial
    # positions in a single epilogue chain.
    out = out_pad[:Cout, :NHW].reshape(Cout, N, H, W)[:, :, :OH, :OW]
    return jnp.transpose(out, (1, 0, 2, 3))                     # (N, C_out, OH, OW)


def _reference(x, w, b, gamma, beta):
    """Pure-JAX f32 reference: Conv2d + training-mode BatchNorm2d."""
    y = jax.lax.conv_general_dilated(
        x.astype(jnp.float32), w.astype(jnp.float32), (1, 1), "VALID",
        dimension_numbers=("NCHW", "OIHW", "NCHW"),
        precision=jax.lax.Precision.HIGHEST)
    y = y + b.reshape(1, -1, 1, 1)
    mean = jnp.mean(y, axis=(0, 2, 3), keepdims=True)
    var = jnp.mean((y - mean) ** 2, axis=(0, 2, 3), keepdims=True)
    yh = (y - mean) * jax.lax.rsqrt(var + EPS)
    return yh * gamma.reshape(1, -1, 1, 1) + beta.reshape(1, -1, 1, 1)


if __name__ == "__main__":
    key = jax.random.PRNGKey(0)
    k_x, k_w, k_b = jax.random.split(key, 3)

    # Conv2d(3, 3, 3) fixes C_in = C_out = 3; small batch/spatial sizes.
    N, Cin, H, W = 2, 3, 16, 16
    x = jax.random.normal(k_x, (N, Cin, H, W), dtype=jnp.float32)
    conv_w = jax.random.normal(k_w, (3, 3, 3, 3), dtype=jnp.float32) * 0.1
    conv_b = jax.random.normal(k_b, (3,), dtype=jnp.float32) * 0.1
    bn_gamma = jnp.ones((3,), dtype=jnp.float32)   # BatchNorm default affine init
    bn_beta = jnp.zeros((3,), dtype=jnp.float32)

    out = model2_forward(x, conv_w, conv_b, bn_gamma, bn_beta)
    out = jax.block_until_ready(out)
    assert out.shape == (N, 3, H - 2, W - 2), out.shape

    ref = _reference(x, conv_w, conv_b, bn_gamma, bn_beta)
    err = float(jnp.max(jnp.abs(out - ref)))
    assert err < 1e-1, f"max abs error {err}"      # loose: bf16 MXU inputs
    print("KERNEL_OK")
</pallas_src>

<mosaic_0001>
module attributes {stable_mosaic.version = 11 : i64} {
  func.func @kernel(%arg0: i32, %arg1: memref<8x640xbf16, #tpu.memory_space<vmem>>, %arg2: memref<8x72xbf16, #tpu.memory_space<vmem>>, %arg3: memref<8x2xf32, #tpu.memory_space<vmem>>, %arg4: memref<1x512xf32, #tpu.memory_space<vmem>>, %arg5: memref<8x512xf32, #tpu.memory_space<vmem>>) attributes {dimension_semantics = [#tpu.dimension_semantics<arbitrary>], iteration_bounds = array<i64: 1>, scalar_prefetch = 0 : i64, scratch_operands = 0 : i64, tpu.core_type = #tpu.core_type<tc>, window_params = [{pipeline_mode = #tpu.pipeline_mode<synchronous>, transform_indices = @transform_0, window_bounds = array<i64: 8, 640>}, {pipeline_mode = #tpu.pipeline_mode<synchronous>, transform_indices = @transform_1, window_bounds = array<i64: 8, 72>}, {pipeline_mode = #tpu.pipeline_mode<synchronous>, transform_indices = @transform_2, window_bounds = array<i64: 8, 2>}, {pipeline_mode = #tpu.pipeline_mode<synchronous>, transform_indices = @transform_3, window_bounds = array<i64: 1, 512>}, {pipeline_mode = #tpu.pipeline_mode<synchronous>, transform_indices = @transform_4, window_bounds = array<i64: 8, 512>}]} {
    %c0 = arith.constant 0 : index
    %c0_0 = arith.constant 0 : index
    %0 = vector.load %arg1[%c0, %c0_0] : memref<8x640xbf16, #tpu.memory_space<vmem>>, vector<8x512xbf16>
    %c0_1 = arith.constant 0 : index
    %c0_2 = arith.constant 0 : index
    %1 = vector.load %arg2[%c0_1, %c0_2] : memref<8x72xbf16, #tpu.memory_space<vmem>>, vector<8x8xbf16>
    %cst = arith.constant dense<0.000000e+00> : vector<8x512xf32>
    %2 = tpu.matmul %1, %0, %cst {dimension_numbers = #tpu.dot_dimension_numbers<[1], [0], [0], [1], [0, 0, 1, 1], [], []>} : vector<8x8xbf16>, vector<8x512xbf16>, vector<8x512xf32> -> vector<8x512xf32>
    %c0_3 = arith.constant 0 : index
    %c1 = arith.constant 1 : index
    %3 = vector.load %arg1[%c0_3, %c1] : memref<8x640xbf16, #tpu.memory_space<vmem>>, vector<8x512xbf16>
    %c0_4 = arith.constant 0 : index
    %c8 = arith.constant 8 : index
    %4 = vector.load %arg2[%c0_4, %c8] : memref<8x72xbf16, #tpu.memory_space<vmem>>, vector<8x8xbf16>
    %cst_5 = arith.constant dense<0.000000e+00> : vector<8x512xf32>
    %5 = tpu.matmul %4, %3, %cst_5 {dimension_numbers = #tpu.dot_dimension_numbers<[1], [0], [0], [1], [0, 0, 1, 1], [], []>} : vector<8x8xbf16>, vector<8x512xbf16>, vector<8x512xf32> -> vector<8x512xf32>
    %6 = arith.addf %2, %5 : vector<8x512xf32>
    %c0_6 = arith.constant 0 : index
    %c2 = arith.constant 2 : index
    %7 = vector.load %arg1[%c0_6, %c2] : memref<8x640xbf16, #tpu.memory_space<vmem>>, vector<8x512xbf16>
    %c0_7 = arith.constant 0 : index
    %c16 = arith.constant 16 : index
    %8 = vector.load %arg2[%c0_7, %c16] : memref<8x72xbf16, #tpu.memory_space<vmem>>, vector<8x8xbf16>
    %cst_8 = arith.constant dense<0.000000e+00> : vector<8x512xf32>
    %9 = tpu.matmul %8, %7, %cst_8 {dimension_numbers = #tpu.dot_dimension_numbers<[1], [0], [0], [1], [0, 0, 1, 1], [], []>} : vector<8x8xbf16>, vector<8x512xbf16>, vector<8x512xf32> -> vector<8x512xf32>
    %10 = arith.addf %6, %9 : vector<8x512xf32>
    %c0_9 = arith.constant 0 : index
    %c16_10 = arith.constant 16 : index
    %11 = vector.load %arg1[%c0_9, %c16_10] : memref<8x640xbf16, #tpu.memory_space<vmem>>, vector<8x512xbf16>
    %c0_11 = arith.constant 0 : index
    %c24 = arith.constant 24 : index
    %12 = vector.load %arg2[%c0_11, %c24] : memref<8x72xbf16, #tpu.memory_space<vmem>>, vector<8x8xbf16>
    %cst_12 = arith.constant dense<0.000000e+00> : vector<8x512xf32>
    %13 = tpu.matmul %12, %11, %cst_12 {dimension_numbers = #tpu.dot_dimension_numbers<[1], [0], [0], [1], [0, 0, 1, 1], [], []>} : vector<8x8xbf16>, vector<8x512xbf16>, vector<8x512xf32> -> vector<8x512xf32>
    %14 = arith.addf %10, %13 : vector<8x512xf32>
    %c0_13 = arith.constant 0 : index
    %c17 = arith.constant 17 : index
    %15 = vector.load %arg1[%c0_13, %c17] : memref<8x640xbf16, #tpu.memory_space<vmem>>, vector<8x512xbf16>
    %c0_14 = arith.constant 0 : index
    %c32 = arith.constant 32 : index
    %16 = vector.load %arg2[%c0_14, %c32] : memref<8x72xbf16, #tpu.memory_space<vmem>>, vector<8x8xbf16>
    %cst_15 = arith.constant dense<0.000000e+00> : vector<8x512xf32>
    %17 = tpu.matmul %16, %15, %cst_15 {dimension_numbers = #tpu.dot_dimension_numbers<[1], [0], [0], [1], [0, 0, 1, 1], [], []>} : vector<8x8xbf16>, vector<8x512xbf16>, vector<8x512xf32> -> vector<8x512xf32>
    %18 = arith.addf %14, %17 : vector<8x512xf32>
    %c0_16 = arith.constant 0 : index
    %c18 = arith.constant 18 : index
    %19 = vector.load %arg1[%c0_16, %c18] : memref<8x640xbf16, #tpu.memory_space<vmem>>, vector<8x512xbf16>
    %c0_17 = arith.constant 0 : index
    %c40 = arith.constant 40 : index
    %20 = vector.load %arg2[%c0_17, %c40] : memref<8x72xbf16, #tpu.memory_space<vmem>>, vector<8x8xbf16>
    %cst_18 = arith.constant dense<0.000000e+00> : vector<8x512xf32>
    %21 = tpu.matmul %20, %19, %cst_18 {dimension_numbers = #tpu.dot_dimension_numbers<[1], [0], [0], [1], [0, 0, 1, 1], [], []>} : vector<8x8xbf16>, vector<8x512xbf16>, vector<8x512xf32> -> vector<8x512xf32>
    %22 = arith.addf %18, %21 : vector<8x512xf32>
    %c0_19 = arith.constant 0 : index
    %c32_20 = arith.constant 32 : index
    %23 = vector.load %arg1[%c0_19, %c32_20] : memref<8x640xbf16, #tpu.memory_space<vmem>>, vector<8x512xbf16>
    %c0_21 = arith.constant 0 : index
    %c48 = arith.constant 48 : index
    %24 = vector.load %arg2[%c0_21, %c48] : memref<8x72xbf16, #tpu.memory_space<vmem>>, vector<8x8xbf16>
    %cst_22 = arith.constant dense<0.000000e+00> : vector<8x512xf32>
    %25 = tpu.matmul %24, %23, %cst_22 {dimension_numbers = #tpu.dot_dimension_numbers<[1], [0], [0], [1], [0, 0, 1, 1], [], []>} : vector<8x8xbf16>, vector<8x512xbf16>, vector<8x512xf32> -> vector<8x512xf32>
    %26 = arith.addf %22, %25 : vector<8x512xf32>
    %c0_23 = arith.constant 0 : index
    %c33 = arith.constant 33 : index
    %27 = vector.load %arg1[%c0_23, %c33] : memref<8x640xbf16, #tpu.memory_space<vmem>>, vector<8x512xbf16>
    %c0_24 = arith.constant 0 : index
    %c56 = arith.constant 56 : index
    %28 = vector.load %arg2[%c0_24, %c56] : memref<8x72xbf16, #tpu.memory_space<vmem>>, vector<8x8xbf16>
    %cst_25 = arith.constant dense<0.000000e+00> : vector<8x512xf32>
    %29 = tpu.matmul %28, %27, %cst_25 {dimension_numbers = #tpu.dot_dimension_numbers<[1], [0], [0], [1], [0, 0, 1, 1], [], []>} : vector<8x8xbf16>, vector<8x512xbf16>, vector<8x512xf32> -> vector<8x512xf32>
    %30 = arith.addf %26, %29 : vector<8x512xf32>
    %c0_26 = arith.constant 0 : index
    %c34 = arith.constant 34 : index
    %31 = vector.load %arg1[%c0_26, %c34] : memref<8x640xbf16, #tpu.memory_space<vmem>>, vector<8x512xbf16>
    %c0_27 = arith.constant 0 : index
    %c64 = arith.constant 64 : index
    %32 = vector.load %arg2[%c0_27, %c64] : memref<8x72xbf16, #tpu.memory_space<vmem>>, vector<8x8xbf16>
    %cst_28 = arith.constant dense<0.000000e+00> : vector<8x512xf32>
    %33 = tpu.matmul %32, %31, %cst_28 {dimension_numbers = #tpu.dot_dimension_numbers<[1], [0], [0], [1], [0, 0, 1, 1], [], []>} : vector<8x8xbf16>, vector<8x512xbf16>, vector<8x512xf32> -> vector<8x512xf32>
    %34 = arith.addf %30, %33 : vector<8x512xf32>
    %c0_29 = arith.constant 0 : index
    %c0_30 = arith.constant 0 : index
    %35 = vector.load %arg4[%c0_29, %c0_30] : memref<1x512xf32, #tpu.memory_space<vmem>>, vector<1x512xf32>
    %36 = vector.broadcast %35 : vector<1x512xf32> to vector<8x512xf32>
    %37 = arith.mulf %34, %36 : vector<8x512xf32>
    %cst_31 = arith.constant dense<0.000000e+00> : vector<8xf32>
    %38 = vector.multi_reduction <add>, %37, %cst_31 [1] : vector<8x512xf32> to vector<8xf32>
    %39 = vector.shape_cast %38 : vector<8xf32> to vector<8x1xf32>
    %cst_32 = arith.constant 0.00255102036 : f32
    %40 = vector.broadcast %cst_32 : f32 to vector<8x1xf32>
    %41 = arith.mulf %39, %40 : vector<8x1xf32>
    %42 = vector.broadcast %41 : vector<8x1xf32> to vector<8x512xf32>
    %43 = arith.subf %34, %42 : vector<8x512xf32>
    %44 = arith.mulf %43, %43 : vector<8x512xf32>
    %45 = vector.broadcast %35 : vector<1x512xf32> to vector<8x512xf32>
    %46 = arith.mulf %44, %45 : vector<8x512xf32>
    %cst_33 = arith.constant dense<0.000000e+00> : vector<8xf32>
    %47 = vector.multi_reduction <add>, %46, %cst_33 [1] : vector<8x512xf32> to vector<8xf32>
    %48 = vector.shape_cast %47 : vector<8xf32> to vector<8x1xf32>
    %cst_34 = arith.constant 0.00255102036 : f32
    %49 = vector.broadcast %cst_34 : f32 to vector<8x1xf32>
    %50 = arith.mulf %48, %49 : vector<8x1xf32>
    %c0_35 = arith.constant 0 : index
    %c0_36 = arith.constant 0 : index
    %51 = vector.load %arg3[%c0_35, %c0_36] : memref<8x2xf32, #tpu.memory_space<vmem>>, vector<8x1xf32>
    %c0_37 = arith.constant 0 : index
    %c1_38 = arith.constant 1 : index
    %52 = vector.load %arg3[%c0_37, %c1_38] : memref<8x2xf32, #tpu.memory_space<vmem>>, vector<8x1xf32>
    %cst_39 = arith.constant 9.99999974E-6 : f32
    %53 = vector.broadcast %cst_39 : f32 to vector<8x1xf32>
    %54 = arith.addf %50, %53 : vector<8x1xf32>
    %55 = math.rsqrt %54 : vector<8x1xf32>
    %56 = arith.mulf %51, %55 : vector<8x1xf32>
    %57 = vector.broadcast %56 : vector<8x1xf32> to vector<8x512xf32>
    %58 = arith.mulf %43, %57 : vector<8x512xf32>
    %59 = vector.broadcast %52 : vector<8x1xf32> to vector<8x512xf32>
    %60 = arith.addf %58, %59 : vector<8x512xf32>
    %c0_40 = arith.constant 0 : index
    %c0_41 = arith.constant 0 : index
    %61 = vector.load %arg5[%c0_40, %c0_41] : memref<8x512xf32, #tpu.memory_space<vmem>>, vector<8x512xf32>
    tpu.vector_store %arg5[%c0_40, %c0_41], %60 {strides = array<i32>} : memref<8x512xf32, #tpu.memory_space<vmem>>, vector<8x512xf32>,
    return
  }
  func.func @transform_0(%arg0: i32) -> (i32, i32) {
    %c0_i32 = arith.constant 0 : i32
    %c0_i32_0 = arith.constant 0 : i32
    %c0_i32_1 = arith.constant 0 : i32
    return %c0_i32, %c0_i32_0 : i32, i32
  }
  func.func @transform_1(%arg0: i32) -> (i32, i32) {
    %c0_i32 = arith.constant 0 : i32
    %c0_i32_0 = arith.constant 0 : i32
    %c0_i32_1 = arith.constant 0 : i32
    return %c0_i32, %c0_i32_0 : i32, i32
  }
  func.func @transform_2(%arg0: i32) -> (i32, i32) {
    %c0_i32 = arith.constant 0 : i32
    %c0_i32_0 = arith.constant 0 : i32
    %c0_i32_1 = arith.constant 0 : i32
    return %c0_i32, %c0_i32_0 : i32, i32
  }
  func.func @transform_3(%arg0: i32) -> (i32, i32) {
    %c0_i32 = arith.constant 0 : i32
    %c0_i32_0 = arith.constant 0 : i32
    %c0_i32_1 = arith.constant 0 : i32
    return %c0_i32, %c0_i32_0 : i32, i32
  }
  func.func @transform_4(%arg0: i32) -> (i32, i32) {
    %c0_i32 = arith.constant 0 : i32
    %c0_i32_0 = arith.constant 0 : i32
    %c0_i32_1 = arith.constant 0 : i32
    return %c0_i32, %c0_i32_0 : i32, i32
  }
}

</mosaic_0001>

<llo_original>
// kernel: tpu_custom_call.1
$region0: #{tpu_custom_call.1}
  #allocation0 [shape = 'u32[]', space=smem, size = 0x4, offset = 0x4, fixed_abs, tag = 'smem constant byte address 0x4 - core index']
  #allocation1 [shape = 'u32[144,128]{1,0:T(1,128)}', space=vmem, size = 0x12000, scoped, tag = 'internal scratch']
  %s0 = inlined_call_operand.hbm [shape: bf16[8,640], index: 0, kind: input, shape index: {}]
  %s1 = inlined_call_operand.vmem [shape: bf16[8,72], index: 1, kind: input, shape index: {}]
  %s2 = inlined_call_operand.vmem [shape: f32[8,2], index: 2, kind: input, shape index: {}]
  %s3 = inlined_call_operand.vmem [shape: f32[1,512], index: 3, kind: input, shape index: {}]
  %s4 = inlined_call_operand.hbm [shape: f32[8,512], index: 4, kind: output, shape index: {}]
  %s5 = sld [smem:[#allocation0]]
  $region30: #{tpu_custom_call.1} parent=0
    _
  %s7 = ssub.s32 1, %s5
  %s8 = scalar_select 0, %s7, %s5
  $region1: #{tpu_custom_call.1} parent=0
    #allocation2 [shape = 'u8[10240]{0}', space=vmem, size = 0x2800, scoped, tag = 'input window, operand 0, single buffered']
    #allocation3 [shape = 's32[1]{0}', space=sflag, size = 0x4, scoped, tag = 'scoped memory for tpu_custom_call.1']
    #allocation4 [shape = 's32[1]{0}', space=sflag, size = 0x4, scoped, tag = 'scoped memory for tpu_custom_call.1']
    #allocation5 [shape = 'u8[16384]{0}', space=vmem, size = 0x4000, scoped, tag = 'output window, operand 0, single buffered']
    %9 = vsyncpa [#allocation3], 0
    %10 = vsyncpa [#allocation4], 0
    // Predicated region
    $region2: #{tpu_custom_call.1} parent=1 // pred_check
      _
    $region3: #{tpu_custom_call.1} parent=1 // pred_check_branch
      %12 = sbr.rel (0) target = $region5
    $region4: #{tpu_custom_call.1} parent=1 // pred_region
      %s14 = ssub.s32 320, 320
      %15 = vsyncadd [#allocation3], %s14
      %s17 = sshll.u32 [#allocation2], 4
      %s18 = int_to_ptr.vmem [resolvable:$true] %s17
      %20 = dma.hbm_to_vmem [thread:$0]  %s0, 320, %s18, [#allocation3]
    $region5: #{tpu_custom_call.1} parent=1 // pred_fallthru
      _
    // Predicated region
    $region6: #{tpu_custom_call.1} parent=1 // pred_check
      _
    $region7: #{tpu_custom_call.1} parent=1 // pred_check_branch
      %22 = sbr.rel (0) target = $region9
    $region8: #{tpu_custom_call.1} parent=1 // pred_region
      _
    $region9: #{tpu_custom_call.1} parent=1 // pred_fallthru
      _
    // Predicated region
    $region10: #{tpu_custom_call.1} parent=1 // pred_check
      _
    $region11: #{tpu_custom_call.1} parent=1 // pred_check_branch
      %24 = sbr.rel (0) target = $region13
    $region12: #{tpu_custom_call.1} parent=1 // pred_region
      _
    $region13: #{tpu_custom_call.1} parent=1 // pred_fallthru
      _
    // Predicated region
    $region14: #{tpu_custom_call.1} parent=1 // pred_check
      _
    $region15: #{tpu_custom_call.1} parent=1 // pred_check_branch
      %26 = sbr.rel (0) target = $region17
    $region16: #{tpu_custom_call.1} parent=1 // pred_region
      _
    $region17: #{tpu_custom_call.1} parent=1 // pred_fallthru
      _
    // Predicated region
    $region18: #{tpu_custom_call.1} parent=1 // pred_check
      _
    $region19: #{tpu_custom_call.1} parent=1 // pred_check_branch
      %28 = sbr.rel (0) target = $region21
    $region20: #{tpu_custom_call.1} parent=1 // pred_region
      %29 = dma.done [#allocation3], 320
    $region21: #{tpu_custom_call.1} parent=1 // pred_fallthru
      _
    %v31 = vld [vmem:[#allocation2] sm:$0xff]
    %v32 = vld [vmem:[#allocation2 + $0x8] sm:$0xff]
    %v33 = vld [vmem:[%s1] sm:$0xf]
    %v34 = vld [vmem:[#allocation2] sm:$0xff]
    %v35 = vld [vmem:[#allocation2 + $0x8] sm:$0xff]
    %v36 = vld [vmem:[#allocation2 + $0x10] sm:$0xf]
    %v38 = vunpack.c.l.b16 %v33
    %v39 = vpack.c.b16 %v38, %v38
    %40 = vrot.lane.b32.xlu0 %v39, 120
    %v41 = vpop.permute.xlu0 %40
    %v45 = vunpack.c.l.b16 %v34
    %v46 = vunpack.c.h.b16 %v34
    %v47 = vunpack.c.l.b16 %v35
    %v48 = vunpack.c.h.b16 %v35
    %v49 = vunpack.c.l.b16 %v36
    %v50 = vpack.c.b16 %v45, %v45
    %v51 = vpack.c.b16 %v46, %v46
    %v52 = vpack.c.b16 %v47, %v47
    %v53 = vpack.c.b16 %v48, %v48
    %v54 = vpack.c.b16 %v49, %v49
    %55 = vrot.lane.b32.xlu0 %v50, 127
    %v56 = vpop.permute.xlu0 %55
    %57 = vrot.lane.b32.xlu0 %v51, 127
    %v58 = vpop.permute.xlu0 %57
    %59 = vrot.lane.b32.xlu0 %v52, 127
    %v60 = vpop.permute.xlu0 %59
    %61 = vrot.lane.b32.xlu0 %v53, 127
    %v62 = vpop.permute.xlu0 %61
    %63 = vrot.lane.b32.xlu0 %v54, 127
    %v64 = vpop.permute.xlu0 %63
    %vm65 = vcmask 1039360
    %v66 = vsel %vm65, %v56, %v58
    %v67 = vsel %vm65, %v58, %v60
    %v68 = vsel %vm65, %v60, %v62
    %v69 = vsel %vm65, %v62, %v64
    %vm70 = vcmask 64512
    %v72 = vsel %vm70, %v41, 0
    %vm74 = vcmask 1043456
    %v76 = vsel %vm74, %v66, 0
    %v79 = vsel %vm74, %v67, 0
    %v82 = vsel %vm74, %v68, 0
    %v85 = vsel %vm74, %v69, 0
    %87 = vmatprep.subr.bf16.mxu0 0
    %88 = vmatpush1.bf16.msra.mxu0 0
    %89 = vmatprep.subr.bf16.mxu0 0
    %90 = vmatpush1.bf16.msra.mxu0 0
    %91 = vmatprep.subr.bf16.mxu0 0
    %92 = vmatpush1.bf16.msra.mxu0 0
    %93 = vmatprep.subr.bf16.mxu0 0
    %94 = vmatpush1.bf16.msra.mxu0 0
    %95 = vmatprep.subr.bf16.mxu0 0
    %96 = vmatpush1.bf16.msra.mxu0 0
    %97 = vmatprep.subr.bf16.mxu0 0
    %98 = vmatpush1.bf16.msra.mxu0 0
    %99 = vmatprep.subr.bf16.mxu0 0
    %100 = vmatpush1.bf16.msra.mxu0 0
    %101 = vmatprep.subr.bf16.mxu0 %v79
    %102 = vmatpush1.bf16.msra.mxu0 %v76
    %103 = vmatprep.subr.bf16.mxu0 0
    %104 = vmatpush2.bf16.msra.mxu0 0
    %105 = vmatprep.subr.bf16.mxu0 0
    %106 = vmatpush2.bf16.msra.mxu0 0
    %107 = vmatprep.subr.bf16.mxu0 0
    %108 = vmatpush2.bf16.msra.mxu0 0
    %109 = vmatprep.subr.bf16.mxu0 0
    %110 = vmatpush2.bf16.msra.mxu0 0
    %111 = vmatprep.subr.bf16.mxu0 0
    %112 = vmatpush2.bf16.msra.mxu0 0
    %113 = vmatprep.subr.bf16.mxu0 0
    %114 = vmatpush2.bf16.msra.mxu0 0
    %115 = vmatprep.subr.bf16.mxu0 0
    %116 = vmatpush2.bf16.msra.mxu0 0
    %117 = vmatprep.subr.bf16.mxu0 0
    %118 = vmatpush2.bf16.msra.mxu0 0
    %119 = vmatprep.mubr.bf16.mxu0 0
    %120 = vmatmul.mubr.bf16.gmra.mxu0 %v72
    %v121 = vpop.f32.mrf.mxu0
    %v122 = vadd.f32 0.0, %v121
    %v123 = vpop.f32.mrf.mxu0
    %v124 = vadd.f32 0.0, %v123
    %v125 = vpop.f32.mrf.mxu0
    %v126 = vpop.f32.mrf.mxu0
    %127 = vdwg.mxu0
    %128 = vmatprep.subr.bf16.mxu0 0
    %129 = vmatpush1.bf16.msra.mxu0 0
    %130 = vmatprep.subr.bf16.mxu0 0
    %131 = vmatpush1.bf16.msra.mxu0 0
    %132 = vmatprep.subr.bf16.mxu0 0
    %133 = vmatpush1.bf16.msra.mxu0 0
    %134 = vmatprep.subr.bf16.mxu0 0
    %135 = vmatpush1.bf16.msra.mxu0 0
    %136 = vmatprep.subr.bf16.mxu0 0
    %137 = vmatpush1.bf16.msra.mxu0 0
    %138 = vmatprep.subr.bf16.mxu0 0
    %139 = vmatpush1.bf16.msra.mxu0 0
    %140 = vmatprep.subr.bf16.mxu0 0
    %141 = vmatpush1.bf16.msra.mxu0 0
    %142 = vmatprep.subr.bf16.mxu0 %v85
    %143 = vmatpush1.bf16.msra.mxu0 %v82
    %144 = vmatprep.subr.bf16.mxu0 0
    %145 = vmatpush2.bf16.msra.mxu0 0
    %146 = vmatprep.subr.bf16.mxu0 0
    %147 = vmatpush2.bf16.msra.mxu0 0
    %148 = vmatprep.subr.bf16.mxu0 0
    %149 = vmatpush2.bf16.msra.mxu0 0
    %150 = vmatprep.subr.bf16.mxu0 0
    %151 = vmatpush2.bf16.msra.mxu0 0
    %152 = vmatprep.subr.bf16.mxu0 0
    %153 = vmatpush2.bf16.msra.mxu0 0
    %154 = vmatprep.subr.bf16.mxu0 0
    %155 = vmatpush2.bf16.msra.mxu0 0
    %156 = vmatprep.subr.bf16.mxu0 0
    %157 = vmatpush2.bf16.msra.mxu0 0
    %158 = vmatprep.subr.bf16.mxu0 0
    %159 = vmatpush2.bf16.msra.mxu0 0
    %160 = vmatprep.mubr.bf16.mxu0 0
    %161 = vmatmul.mubr.bf16.gmra.mxu0 %v72
    %v162 = vpop.f32.mrf.mxu0
    %v163 = vadd.f32 0.0, %v162
    %v164 = vpop.f32.mrf.mxu0
    %v165 = vadd.f32 0.0, %v164
    %v166 = vpop.f32.mrf.mxu0
    %v167 = vpop.f32.mrf.mxu0
    %168 = vdwg.mxu0
    %v171 = vunpack.c.l.b16 %v31
    %v172 = vunpack.c.h.b16 %v31
    %v173 = vunpack.c.l.b16 %v32
    %v174 = vunpack.c.h.b16 %v32
    %v175 = vpack.c.b16 %v171, %v171
    %v176 = vpack.c.b16 %v172, %v172
    %v177 = vpack.c.b16 %v173, %v173
    %v178 = vpack.c.b16 %v174, %v174
    %v180 = vsel %vm70, %v33, 0
    %v183 = vsel %vm74, %v175, 0
    %v186 = vsel %vm74, %v176, 0
    %v189 = vsel %vm74, %v177, 0
    %v192 = vsel %vm74, %v178, 0
    %194 = vmatprep.subr.bf16.mxu0 0
    %195 = vmatpush1.bf16.msra.mxu0 0
    %196 = vmatprep.subr.bf16.mxu0 0
    %197 = vmatpush1.bf16.msra.mxu0 0
    %198 = vmatprep.subr.bf16.mxu0 0
    %199 = vmatpush1.bf16.msra.mxu0 0
    %200 = vmatprep.subr.bf16.mxu0 0
    %201 = vmatpush1.bf16.msra.mxu0 0
    %202 = vmatprep.subr.bf16.mxu0 0
    %203 = vmatpush1.bf16.msra.mxu0 0
    %204 = vmatprep.subr.bf16.mxu0 0
    %205 = vmatpush1.bf16.msra.mxu0 0
    %206 = vmatprep.subr.bf16.mxu0 0
    %207 = vmatpush1.bf16.msra.mxu0 0
    %208 = vmatprep.subr.bf16.mxu0 %v186
    %209 = vmatpush1.bf16.msra.mxu0 %v183
    %210 = vmatprep.subr.bf16.mxu0 0
    %211 = vmatpush2.bf16.msra.mxu0 0
    %212 = vmatprep.subr.bf16.mxu0 0
    %213 = vmatpush2.bf16.msra.mxu0 0
    %214 = vmatprep.subr.bf16.mxu0 0
    %215 = vmatpush2.bf16.msra.mxu0 0
    %216 = vmatprep.subr.bf16.mxu0 0
    %217 = vmatpush2.bf16.msra.mxu0 0
    %218 = vmatprep.subr.bf16.mxu0 0
    %219 = vmatpush2.bf16.msra.mxu0 0
    %220 = vmatprep.subr.bf16.mxu0 0
    %221 = vmatpush2.bf16.msra.mxu0 0
    %222 = vmatprep.subr.bf16.mxu0 0
    %223 = vmatpush2.bf16.msra.mxu0 0
    %224 = vmatprep.subr.bf16.mxu0 0
    %225 = vmatpush2.bf16.msra.mxu0 0
    %226 = vmatprep.mubr.bf16.mxu0 0
    %227 = vmatmul.mubr.bf16.gmra.mxu0 %v180
    %v228 = vpop.f32.mrf.mxu0
    %v229 = vadd.f32 %v122, %v228
    %v230 = vpop.f32.mrf.mxu0
    %v231 = vadd.f32 %v124, %v230
    %v232 = vpop.f32.mrf.mxu0
    %v233 = vpop.f32.mrf.mxu0
    %234 = vdwg.mxu0
    %235 = vmatprep.subr.bf16.mxu0 0
    %236 = vmatpush1.bf16.msra.mxu0 0
    %237 = vmatprep.subr.bf16.mxu0 0
    %238 = vmatpush1.bf16.msra.mxu0 0
    %239 = vmatprep.subr.bf16.mxu0 0
    %240 = vmatpush1.bf16.msra.mxu0 0
    %241 = vmatprep.subr.bf16.mxu0 0
    %242 = vmatpush1.bf16.msra.mxu0 0
    %243 = vmatprep.subr.bf16.mxu0 0
    %244 = vmatpush1.bf16.msra.mxu0 0
    %245 = vmatprep.subr.bf16.mxu0 0
    %246 = vmatpush1.bf16.msra.mxu0 0
    %247 = vmatprep.subr.bf16.mxu0 0
    %248 = vmatpush1.bf16.msra.mxu0 0
    %249 = vmatprep.subr.bf16.mxu0 %v192
    %250 = vmatpush1.bf16.msra.mxu0 %v189
    %251 = vmatprep.subr.bf16.mxu0 0
    %252 = vmatpush2.bf16.msra.mxu0 0
    %253 = vmatprep.subr.bf16.mxu0 0
    %254 = vmatpush2.bf16.msra.mxu0 0
    %255 = vmatprep.subr.bf16.mxu0 0
    %256 = vmatpush2.bf16.msra.mxu0 0
    %257 = vmatprep.subr.bf16.mxu0 0
    %258 = vmatpush2.bf16.msra.mxu0 0
    %259 = vmatprep.subr.bf16.mxu0 0
    %260 = vmatpush2.bf16.msra.mxu0 0
    %261 = vmatprep.subr.bf16.mxu0 0
    %262 = vmatpush2.bf16.msra.mxu0 0
    %263 = vmatprep.subr.bf16.mxu0 0
    %264 = vmatpush2.bf16.msra.mxu0 0
    %265 = vmatprep.subr.bf16.mxu0 0
    %266 = vmatpush2.bf16.msra.mxu0 0
    %267 = vmatprep.mubr.bf16.mxu0 0
    %268 = vmatmul.mubr.bf16.gmra.mxu0 %v180
    %v269 = vpop.f32.mrf.mxu0
    %v270 = vadd.f32 %v163, %v269
    %v271 = vpop.f32.mrf.mxu0
    %v272 = vadd.f32 %v165, %v271
    %v273 = vpop.f32.mrf.mxu0
    %v274 = vpop.f32.mrf.mxu0
    %275 = vdwg.mxu0
    %276 = vrot.lane.b32.xlu0 %v39, 112
    %v277 = vpop.permute.xlu0 %276
    %278 = vrot.lane.b32.xlu0 %v50, 126
    %v279 = vpop.permute.xlu0 %278
    %280 = vrot.lane.b32.xlu0 %v51, 126
    %v281 = vpop.permute.xlu0 %280
    %282 = vrot.lane.b32.xlu0 %v52, 126
    %v283 = vpop.permute.xlu0 %282
    %284 = vrot.lane.b32.xlu0 %v53, 126
    %v285 = vpop.permute.xlu0 %284
    %286 = vrot.lane.b32.xlu0 %v54, 126
    %v287 = vpop.permute.xlu0 %286
    %vm288 = vcmask 1031168
    %v289 = vsel %vm288, %v279, %v281
    %v290 = vsel %vm288, %v281, %v283
    %v291 = vsel %vm288, %v283, %v285
    %v292 = vsel %vm288, %v285, %v287
    %v294 = vsel %vm70, %v277, 0
    %v297 = vsel %vm74, %v289, 0
    %v300 = vsel %vm74, %v290, 0
    %v303 = vsel %vm74, %v291, 0
    %v306 = vsel %vm74, %v292, 0
    %308 = vmatprep.subr.bf16.mxu0 0
    %309 = vmatpush1.bf16.msra.mxu0 0
    %310 = vmatprep.subr.bf16.mxu0 0
    %311 = vmatpush1.bf16.msra.mxu0 0
    %312 = vmatprep.subr.bf16.mxu0 0
    %313 = vmatpush1.bf16.msra.mxu0 0
    %314 = vmatprep.subr.bf16.mxu0 0
    %315 = vmatpush1.bf16.msra.mxu0 0
    %316 = vmatprep.subr.bf16.mxu0 0
    %317 = vmatpush1.bf16.msra.mxu0 0
    %318 = vmatprep.subr.bf16.mxu0 0
    %319 = vmatpush1.bf16.msra.mxu0 0
    %320 = vmatprep.subr.bf16.mxu0 0
    %321 = vmatpush1.bf16.msra.mxu0 0
    %322 = vmatprep.subr.bf16.mxu0 %v300
    %323 = vmatpush1.bf16.msra.mxu0 %v297
    %324 = vmatprep.subr.bf16.mxu0 0
    %325 = vmatpush2.bf16.msra.mxu0 0
    %326 = vmatprep.subr.bf16.mxu0 0
    %327 = vmatpush2.bf16.msra.mxu0 0
    %328 = vmatprep.subr.bf16.mxu0 0
    %329 = vmatpush2.bf16.msra.mxu0 0
    %330 = vmatprep.subr.bf16.mxu0 0
    %331 = vmatpush2.bf16.msra.mxu0 0
    %332 = vmatprep.subr.bf16.mxu0 0
    %333 = vmatpush2.bf16.msra.mxu0 0
    %334 = vmatprep.subr.bf16.mxu0 0
    %335 = vmatpush2.bf16.msra.mxu0 0
    %336 = vmatprep.subr.bf16.mxu0 0
    %337 = vmatpush2.bf16.msra.mxu0 0
    %338 = vmatprep.subr.bf16.mxu0 0
    %339 = vmatpush2.bf16.msra.mxu0 0
    %340 = vmatprep.mubr.bf16.mxu0 0
    %341 = vmatmul.mubr.bf16.gmra.mxu0 %v294
    %v342 = vpop.f32.mrf.mxu0
    %v343 = vadd.f32 0.0, %v342
    %v344 = vpop.f32.mrf.mxu0
    %v345 = vadd.f32 0.0, %v344
    %v346 = vpop.f32.mrf.mxu0
    %v347 = vpop.f32.mrf.mxu0
    %348 = vdwg.mxu0
    %349 = vmatprep.subr.bf16.mxu0 0
    %350 = vmatpush1.bf16.msra.mxu0 0
    %351 = vmatprep.subr.bf16.mxu0 0
    %352 = vmatpush1.bf16.msra.mxu0 0
    %353 = vmatprep.subr.bf16.mxu0 0
    %354 = vmatpush1.bf16.msra.mxu0 0
    %355 = vmatprep.subr.bf16.mxu0 0
    %356 = vmatpush1.bf16.msra.mxu0 0
    %357 = vmatprep.subr.bf16.mxu0 0
    %358 = vmatpush1.bf16.msra.mxu0 0
    %359 = vmatprep.subr.bf16.mxu0 0
    %360 = vmatpush1.bf16.msra.mxu0 0
    %361 = vmatprep.subr.bf16.mxu0 0
    %362 = vmatpush1.bf16.msra.mxu0 0
    %363 = vmatprep.subr.bf16.mxu0 %v306
    %364 = vmatpush1.bf16.msra.mxu0 %v303
    %365 = vmatprep.subr.bf16.mxu0 0
    %366 = vmatpush2.bf16.msra.mxu0 0
    %367 = vmatprep.subr.bf16.mxu0 0
    %368 = vmatpush2.bf16.msra.mxu0 0
    %369 = vmatprep.subr.bf16.mxu0 0
    %370 = vmatpush2.bf16.msra.mxu0 0
    %371 = vmatprep.subr.bf16.mxu0 0
    %372 = vmatpush2.bf16.msra.mxu0 0
    %373 = vmatprep.subr.bf16.mxu0 0
    %374 = vmatpush2.bf16.msra.mxu0 0
    %375 = vmatprep.subr.bf16.mxu0 0
    %376 = vmatpush2.bf16.msra.mxu0 0
    %377 = vmatprep.subr.bf16.mxu0 0
    %378 = vmatpush2.bf16.msra.mxu0 0
    %379 = vmatprep.subr.bf16.mxu0 0
    %380 = vmatpush2.bf16.msra.mxu0 0
    %381 = vmatprep.mubr.bf16.mxu0 0
    %382 = vmatmul.mubr.bf16.gmra.mxu0 %v294
    %v383 = vpop.f32.mrf.mxu0
    %v384 = vadd.f32 0.0, %v383
    %v385 = vpop.f32.mrf.mxu0
    %v386 = vadd.f32 0.0, %v385
    %v387 = vpop.f32.mrf.mxu0
    %v388 = vpop.f32.mrf.mxu0
    %389 = vdwg.mxu0
    %v390 = vadd.f32 %v229, %v343
    %v391 = vadd.f32 %v231, %v345
    %v392 = vadd.f32 %v270, %v384
    %v393 = vadd.f32 %v272, %v386
    %394 = vrot.lane.b32.xlu0 %v39, 104
    %v395 = vpop.permute.xlu0 %394
    %396 = vrot.lane.b32.xlu0 %v50, 112
    %v397 = vpop.permute.xlu0 %396
    %398 = vrot.lane.b32.xlu0 %v51, 112
    %v399 = vpop.permute.xlu0 %398
    %400 = vrot.lane.b32.xlu0 %v52, 112
    %v401 = vpop.permute.xlu0 %400
    %402 = vrot.lane.b32.xlu0 %v53, 112
    %v403 = vpop.permute.xlu0 %402
    %404 = vrot.lane.b32.xlu0 %v54, 112
    %v405 = vpop.permute.xlu0 %404
    %vm406 = vcmask 916480
    %v407 = vsel %vm406, %v397, %v399
    %v408 = vsel %vm406, %v399, %v401
    %v409 = vsel %vm406, %v401, %v403
    %v410 = vsel %vm406, %v403, %v405
    %v412 = vsel %vm70, %v395, 0
    %v415 = vsel %vm74, %v407, 0
    %v418 = vsel %vm74, %v408, 0
    %v421 = vsel %vm74, %v409, 0
    %v424 = vsel %vm74, %v410, 0
    %426 = vmatprep.subr.bf16.mxu0 0
    %427 = vmatpush1.bf16.msra.mxu0 0
    %428 = vmatprep.subr.bf16.mxu0 0
    %429 = vmatpush1.bf16.msra.mxu0 0
    %430 = vmatprep.subr.bf16.mxu0 0
    %431 = vmatpush1.bf16.msra.mxu0 0
    %432 = vmatprep.subr.bf16.mxu0 0
    %433 = vmatpush1.bf16.msra.mxu0 0
    %434 = vmatprep.subr.bf16.mxu0 0
    %435 = vmatpush1.bf16.msra.mxu0 0
    %436 = vmatprep.subr.bf16.mxu0 0
    %437 = vmatpush1.bf16.msra.mxu0 0
    %438 = vmatprep.subr.bf16.mxu0 0
    %439 = vmatpush1.bf16.msra.mxu0 0
    %440 = vmatprep.subr.bf16.mxu0 %v418
    %441 = vmatpush1.bf16.msra.mxu0 %v415
    %442 = vmatprep.subr.bf16.mxu0 0
    %443 = vmatpush2.bf16.msra.mxu0 0
    %444 = vmatprep.subr.bf16.mxu0 0
    %445 = vmatpush2.bf16.msra.mxu0 0
    %446 = vmatprep.subr.bf16.mxu0 0
    %447 = vmatpush2.bf16.msra.mxu0 0
    %448 = vmatprep.subr.bf16.mxu0 0
    %449 = vmatpush2.bf16.msra.mxu0 0
    %450 = vmatprep.subr.bf16.mxu0 0
    %451 = vmatpush2.bf16.msra.mxu0 0
    %452 = vmatprep.subr.bf16.mxu0 0
    %453 = vmatpush2.bf16.msra.mxu0 0
    %454 = vmatprep.subr.bf16.mxu0 0
    %455 = vmatpush2.bf16.msra.mxu0 0
    %456 = vmatprep.subr.bf16.mxu0 0
    %457 = vmatpush2.bf16.msra.mxu0 0
    %458 = vmatprep.mubr.bf16.mxu0 0
    %459 = vmatmul.mubr.bf16.gmra.mxu0 %v412
    %v460 = vpop.f32.mrf.mxu0
    %v461 = vadd.f32 0.0, %v460
    %v462 = vpop.f32.mrf.mxu0
    %v463 = vadd.f32 0.0, %v462
    %v464 = vpop.f32.mrf.mxu0
    %v465 = vpop.f32.mrf.mxu0
    %466 = vdwg.mxu0
    %467 = vmatprep.subr.bf16.mxu0 0
    %468 = vmatpush1.bf16.msra.mxu0 0
    %469 = vmatprep.subr.bf16.mxu0 0
    %470 = vmatpush1.bf16.msra.mxu0 0
    %471 = vmatprep.subr.bf16.mxu0 0
    %472 = vmatpush1.bf16.msra.mxu0 0
    %473 = vmatprep.subr.bf16.mxu0 0
    %474 = vmatpush1.bf16.msra.mxu0 0
    %475 = vmatprep.subr.bf16.mxu0 0
    %476 = vmatpush1.bf16.msra.mxu0 0
    %477 = vmatprep.subr.bf16.mxu0 0
    %478 = vmatpush1.bf16.msra.mxu0 0
    %479 = vmatprep.subr.bf16.mxu0 0
    %480 = vmatpush1.bf16.msra.mxu0 0
    %481 = vmatprep.subr.bf16.mxu0 %v424
    %482 = vmatpush1.bf16.msra.mxu0 %v421
    %483 = vmatprep.subr.bf16.mxu0 0
    %484 = vmatpush2.bf16.msra.mxu0 0
    %485 = vmatprep.subr.bf16.mxu0 0
    %486 = vmatpush2.bf16.msra.mxu0 0
    %487 = vmatprep.subr.bf16.mxu0 0
    %488 = vmatpush2.bf16.msra.mxu0 0
    %489 = vmatprep.subr.bf16.mxu0 0
    %490 = vmatpush2.bf16.msra.mxu0 0
    %491 = vmatprep.subr.bf16.mxu0 0
    %492 = vmatpush2.bf16.msra.mxu0 0
    %493 = vmatprep.subr.bf16.mxu0 0
    %494 = vmatpush2.bf16.msra.mxu0 0
    %495 = vmatprep.subr.bf16.mxu0 0
    %496 = vmatpush2.bf16.msra.mxu0 0
    %497 = vmatprep.subr.bf16.mxu0 0
    %498 = vmatpush2.bf16.msra.mxu0 0
    %499 = vmatprep.mubr.bf16.mxu0 0
    %500 = vmatmul.mubr.bf16.gmra.mxu0 %v412
    %v501 = vpop.f32.mrf.mxu0
    %v502 = vadd.f32 0.0, %v501
    %v503 = vpop.f32.mrf.mxu0
    %v504 = vadd.f32 0.0, %v503
    %v505 = vpop.f32.mrf.mxu0
    %v506 = vpop.f32.mrf.mxu0
    %507 = vdwg.mxu0
    %v508 = vadd.f32 %v390, %v461
    %v509 = vadd.f32 %v391, %v463
    %v510 = vadd.f32 %v392, %v502
    %v511 = vadd.f32 %v393, %v504
    %512 = vrot.lane.b32.xlu0 %v39, 96
    %v513 = vpop.permute.xlu0 %512
    %514 = vrot.lane.b32.xlu0 %v50, 111
    %v515 = vpop.permute.xlu0 %514
    %516 = vrot.lane.b32.xlu0 %v51, 111
    %v517 = vpop.permute.xlu0 %516
    %518 = vrot.lane.b32.xlu0 %v52, 111
    %v519 = vpop.permute.xlu0 %518
    %520 = vrot.lane.b32.xlu0 %v53, 111
    %v521 = vpop.permute.xlu0 %520
    %522 = vrot.lane.b32.xlu0 %v54, 111
    %v523 = vpop.permute.xlu0 %522
    %vm524 = vcmask 908288
    %v525 = vsel %vm524, %v515, %v517
    %v526 = vsel %vm524, %v517, %v519
    %v527 = vsel %vm524, %v519, %v521
    %v528 = vsel %vm524, %v521, %v523
    %v530 = vsel %vm70, %v513, 0
    %v533 = vsel %vm74, %v525, 0
    %v536 = vsel %vm74, %v526, 0
    %v539 = vsel %vm74, %v527, 0
    %v542 = vsel %vm74, %v528, 0
    %544 = vmatprep.subr.bf16.mxu0 0
    %545 = vmatpush1.bf16.msra.mxu0 0
    %546 = vmatprep.subr.bf16.mxu0 0
    %547 = vmatpush1.bf16.msra.mxu0 0
    %548 = vmatprep.subr.bf16.mxu0 0
    %549 = vmatpush1.bf16.msra.mxu0 0
    %550 = vmatprep.subr.bf16.mxu0 0
    %551 = vmatpush1.bf16.msra.mxu0 0
    %552 = vmatprep.subr.bf16.mxu0 0
    %553 = vmatpush1.bf16.msra.mxu0 0
    %554 = vmatprep.subr.bf16.mxu0 0
    %555 = vmatpush1.bf16.msra.mxu0 0
    %556 = vmatprep.subr.bf16.mxu0 0
    %557 = vmatpush1.bf16.msra.mxu0 0
    %558 = vmatprep.subr.bf16.mxu0 %v536
    %559 = vmatpush1.bf16.msra.mxu0 %v533
    %560 = vmatprep.subr.bf16.mxu0 0
    %561 = vmatpush2.bf16.msra.mxu0 0
    %562 = vmatprep.subr.bf16.mxu0 0
    %563 = vmatpush2.bf16.msra.mxu0 0
    %564 = vmatprep.subr.bf16.mxu0 0
    %565 = vmatpush2.bf16.msra.mxu0 0
    %566 = vmatprep.subr.bf16.mxu0 0
    %567 = vmatpush2.bf16.msra.mxu0 0
    %568 = vmatprep.subr.bf16.mxu0 0
    %569 = vmatpush2.bf16.msra.mxu0 0
    %570 = vmatprep.subr.bf16.mxu0 0
    %571 = vmatpush2.bf16.msra.mxu0 0
    %572 = vmatprep.subr.bf16.mxu0 0
    %573 = vmatpush2.bf16.msra.mxu0 0
    %574 = vmatprep.subr.bf16.mxu0 0
    %575 = vmatpush2.bf16.msra.mxu0 0
    %576 = vmatprep.mubr.bf16.mxu0 0
    %577 = vmatmul.mubr.bf16.gmra.mxu0 %v530
    %v578 = vpop.f32.mrf.mxu0
    %v579 = vadd.f32 0.0, %v578
    %v580 = vpop.f32.mrf.mxu0
    %v581 = vadd.f32 0.0, %v580
    %v582 = vpop.f32.mrf.mxu0
    %v583 = vpop.f32.mrf.mxu0
    %584 = vdwg.mxu0
    %585 = vmatprep.subr.bf16.mxu0 0
    %586 = vmatpush1.bf16.msra.mxu0 0
    %587 = vmatprep.subr.bf16.mxu0 0
    %588 = vmatpush1.bf16.msra.mxu0 0
    %589 = vmatprep.subr.bf16.mxu0 0
    %590 = vmatpush1.bf16.msra.mxu0 0
    %591 = vmatprep.subr.bf16.mxu0 0
    %592 = vmatpush1.bf16.msra.mxu0 0
    %593 = vmatprep.subr.bf16.mxu0 0
    %594 = vmatpush1.bf16.msra.mxu0 0
    %595 = vmatprep.subr.bf16.mxu0 0
    %596 = vmatpush1.bf16.msra.mxu0 0
    %597 = vmatprep.subr.bf16.mxu0 0
    %598 = vmatpush1.bf16.msra.mxu0 0
    %599 = vmatprep.subr.bf16.mxu0 %v542
    %600 = vmatpush1.bf16.msra.mxu0 %v539
    %601 = vmatprep.subr.bf16.mxu0 0
    %602 = vmatpush2.bf16.msra.mxu0 0
    %603 = vmatprep.subr.bf16.mxu0 0
    %604 = vmatpush2.bf16.msra.mxu0 0
    %605 = vmatprep.subr.bf16.mxu0 0
    %606 = vmatpush2.bf16.msra.mxu0 0
    %607 = vmatprep.subr.bf16.mxu0 0
    %608 = vmatpush2.bf16.msra.mxu0 0
    %609 = vmatprep.subr.bf16.mxu0 0
    %610 = vmatpush2.bf16.msra.mxu0 0
    %611 = vmatprep.subr.bf16.mxu0 0
    %612 = vmatpush2.bf16.msra.mxu0 0
    %613 = vmatprep.subr.bf16.mxu0 0
    %614 = vmatpush2.bf16.msra.mxu0 0
    %615 = vmatprep.subr.bf16.mxu0 0
    %616 = vmatpush2.bf16.msra.mxu0 0
    %617 = vmatprep.mubr.bf16.mxu0 0
    %618 = vmatmul.mubr.bf16.gmra.mxu0 %v530
    %v619 = vpop.f32.mrf.mxu0
    %v620 = vadd.f32 0.0, %v619
    %v621 = vpop.f32.mrf.mxu0
    %v622 = vadd.f32 0.0, %v621
    %v623 = vpop.f32.mrf.mxu0
    %v624 = vpop.f32.mrf.mxu0
    %625 = vdwg.mxu0
    %v626 = vadd.f32 %v508, %v579
    %v627 = vadd.f32 %v509, %v581
    %v628 = vadd.f32 %v510, %v620
    %v629 = vadd.f32 %v511, %v622
    %630 = vrot.lane.b32.xlu0 %v39, 88
    %v631 = vpop.permute.xlu0 %630
    %632 = vrot.lane.b32.xlu0 %v50, 110
    %v633 = vpop.permute.xlu0 %632
    %634 = vrot.lane.b32.xlu0 %v51, 110
    %v635 = vpop.permute.xlu0 %634
    %636 = vrot.lane.b32.xlu0 %v52, 110
    %v637 = vpop.permute.xlu0 %636
    %638 = vrot.lane.b32.xlu0 %v53, 110
    %v639 = vpop.permute.xlu0 %638
    %640 = vrot.lane.b32.xlu0 %v54, 110
    %v641 = vpop.permute.xlu0 %640
    %vm642 = vcmask 900096
    %v643 = vsel %vm642, %v633, %v635
    %v644 = vsel %vm642, %v635, %v637
    %v645 = vsel %vm642, %v637, %v639
    %v646 = vsel %vm642, %v639, %v641
    %v648 = vsel %vm70, %v631, 0
    %v651 = vsel %vm74, %v643, 0
    %v654 = vsel %vm74, %v644, 0
    %v657 = vsel %vm74, %v645, 0
    %v660 = vsel %vm74, %v646, 0
    %662 = vmatprep.subr.bf16.mxu0 0
    %663 = vmatpush1.bf16.msra.mxu0 0
    %664 = vmatprep.subr.bf16.mxu0 0
    %665 = vmatpush1.bf16.msra.mxu0 0
    %666 = vmatprep.subr.bf16.mxu0 0
    %667 = vmatpush1.bf16.msra.mxu0 0
    %668 = vmatprep.subr.bf16.mxu0 0
    %669 = vmatpush1.bf16.msra.mxu0 0
    %670 = vmatprep.subr.bf16.mxu0 0
    %671 = vmatpush1.bf16.msra.mxu0 0
    %672 = vmatprep.subr.bf16.mxu0 0
    %673 = vmatpush1.bf16.msra.mxu0 0
    %674 = vmatprep.subr.bf16.mxu0 0
    %675 = vmatpush1.bf16.msra.mxu0 0
    %676 = vmatprep.subr.bf16.mxu0 %v654
    %677 = vmatpush1.bf16.msra.mxu0 %v651
    %678 = vmatprep.subr.bf16.mxu0 0
    %679 = vmatpush2.bf16.msra.mxu0 0
    %680 = vmatprep.subr.bf16.mxu0 0
    %681 = vmatpush2.bf16.msra.mxu0 0
    %682 = vmatprep.subr.bf16.mxu0 0
    %683 = vmatpush2.bf16.msra.mxu0 0
    %684 = vmatprep.subr.bf16.mxu0 0
    %685 = vmatpush2.bf16.msra.mxu0 0
    %686 = vmatprep.subr.bf16.mxu0 0
    %687 = vmatpush2.bf16.msra.mxu0 0
    %688 = vmatprep.subr.bf16.mxu0 0
    %689 = vmatpush2.bf16.msra.mxu0 0
    %690 = vmatprep.subr.bf16.mxu0 0
    %691 = vmatpush2.bf16.msra.mxu0 0
    %692 = vmatprep.subr.bf16.mxu0 0
    %693 = vmatpush2.bf16.msra.mxu0 0
    %694 = vmatprep.mubr.bf16.mxu0 0
    %695 = vmatmul.mubr.bf16.gmra.mxu0 %v648
    %v696 = vpop.f32.mrf.mxu0
    %v697 = vadd.f32 0.0, %v696
    %v698 = vpop.f32.mrf.mxu0
    %v699 = vadd.f32 0.0, %v698
    %v700 = vpop.f32.mrf.mxu0
    %v701 = vpop.f32.mrf.mxu0
    %702 = vdwg.mxu0
    %703 = vmatprep.subr.bf16.mxu0 0
    %704 = vmatpush1.bf16.msra.mxu0 0
    %705 = vmatprep.subr.bf16.mxu0 0
    %706 = vmatpush1.bf16.msra.mxu0 0
    %707 = vmatprep.subr.bf16.mxu0 0
    %708 = vmatpush1.bf16.msra.mxu0 0
    %709 = vmatprep.subr.bf16.mxu0 0
    %710 = vmatpush1.bf16.msra.mxu0 0
    %711 = vmatprep.subr.bf16.mxu0 0
    %712 = vmatpush1.bf16.msra.mxu0 0
    %713 = vmatprep.subr.bf16.mxu0 0
    %714 = vmatpush1.bf16.msra.mxu0 0
    %715 = vmatprep.subr.bf16.mxu0 0
    %716 = vmatpush1.bf16.msra.mxu0 0
    %717 = vmatprep.subr.bf16.mxu0 %v660
    %718 = vmatpush1.bf16.msra.mxu0 %v657
    %719 = vmatprep.subr.bf16.mxu0 0
    %720 = vmatpush2.bf16.msra.mxu0 0
    %721 = vmatprep.subr.bf16.mxu0 0
    %722 = vmatpush2.bf16.msra.mxu0 0
    %723 = vmatprep.subr.bf16.mxu0 0
    %724 = vmatpush2.bf16.msra.mxu0 0
    %725 = vmatprep.subr.bf16.mxu0 0
    %726 = vmatpush2.bf16.msra.mxu0 0
    %727 = vmatprep.subr.bf16.mxu0 0
    %728 = vmatpush2.bf16.msra.mxu0 0
    %729 = vmatprep.subr.bf16.mxu0 0
    %730 = vmatpush2.bf16.msra.mxu0 0
    %731 = vmatprep.subr.bf16.mxu0 0
    %732 = vmatpush2.bf16.msra.mxu0 0
    %733 = vmatprep.subr.bf16.mxu0 0
    %734 = vmatpush2.bf16.msra.mxu0 0
    %735 = vmatprep.mubr.bf16.mxu0 0
    %736 = vmatmul.mubr.bf16.gmra.mxu0 %v648
    %v737 = vpop.f32.mrf.mxu0
    %v738 = vadd.f32 0.0, %v737
    %v739 = vpop.f32.mrf.mxu0
    %v740 = vadd.f32 0.0, %v739
    %v741 = vpop.f32.mrf.mxu0
    %v742 = vpop.f32.mrf.mxu0
    %743 = vdwg.mxu0
    %v744 = vadd.f32 %v626, %v697
    %v745 = vadd.f32 %v627, %v699
    %v746 = vadd.f32 %v628, %v738
    %v747 = vadd.f32 %v629, %v740
    %748 = vrot.lane.b32.xlu0 %v39, 80
    %v749 = vpop.permute.xlu0 %748
    %750 = vrot.lane.b32.xlu0 %v50, 96
    %v751 = vpop.permute.xlu0 %750
    %752 = vrot.lane.b32.xlu0 %v51, 96
    %v753 = vpop.permute.xlu0 %752
    %754 = vrot.lane.b32.xlu0 %v52, 96
    %v755 = vpop.permute.xlu0 %754
    %756 = vrot.lane.b32.xlu0 %v53, 96
    %v757 = vpop.permute.xlu0 %756
    %758 = vrot.lane.b32.xlu0 %v54, 96
    %v759 = vpop.permute.xlu0 %758
    %vm760 = vcmask 785408
    %v761 = vsel %vm760, %v751, %v753
    %v762 = vsel %vm760, %v753, %v755
    %v763 = vsel %vm760, %v755, %v757
    %v764 = vsel %vm760, %v757, %v759
    %v766 = vsel %vm70, %v749, 0
    %v769 = vsel %vm74, %v761, 0
    %v772 = vsel %vm74, %v762, 0
    %v775 = vsel %vm74, %v763, 0
    %v778 = vsel %vm74, %v764, 0
    %780 = vmatprep.subr.bf16.mxu0 0
    %781 = vmatpush1.bf16.msra.mxu0 0
    %782 = vmatprep.subr.bf16.mxu0 0
    %783 = vmatpush1.bf16.msra.mxu0 0
    %784 = vmatprep.subr.bf16.mxu0 0
    %785 = vmatpush1.bf16.msra.mxu0 0
    %786 = vmatprep.subr.bf16.mxu0 0
    %787 = vmatpush1.bf16.msra.mxu0 0
    %788 = vmatprep.subr.bf16.mxu0 0
    %789 = vmatpush1.bf16.msra.mxu0 0
    %790 = vmatprep.subr.bf16.mxu0 0
    %791 = vmatpush1.bf16.msra.mxu0 0
    %792 = vmatprep.subr.bf16.mxu0 0
    %793 = vmatpush1.bf16.msra.mxu0 0
    %794 = vmatprep.subr.bf16.mxu0 %v772
    %795 = vmatpush1.bf16.msra.mxu0 %v769
    %796 = vmatprep.subr.bf16.mxu0 0
    %797 = vmatpush2.bf16.msra.mxu0 0
    %798 = vmatprep.subr.bf16.mxu0 0
    %799 = vmatpush2.bf16.msra.mxu0 0
    %800 = vmatprep.subr.bf16.mxu0 0
    %801 = vmatpush2.bf16.msra.mxu0 0
    %802 = vmatprep.subr.bf16.mxu0 0
    %803 = vmatpush2.bf16.msra.mxu0 0
    %804 = vmatprep.subr.bf16.mxu0 0
    %805 = vmatpush2.bf16.msra.mxu0 0
    %806 = vmatprep.subr.bf16.mxu0 0
    %807 = vmatpush2.bf16.msra.mxu0 0
    %808 = vmatprep.subr.bf16.mxu0 0
    %809 = vmatpush2.bf16.msra.mxu0 0
    %810 = vmatprep.subr.bf16.mxu0 0
    %811 = vmatpush2.bf16.msra.mxu0 0
    %812 = vmatprep.mubr.bf16.mxu0 0
    %813 = vmatmul.mubr.bf16.gmra.mxu0 %v766
    %v814 = vpop.f32.mrf.mxu0
    %v815 = vadd.f32 0.0, %v814
    %v816 = vpop.f32.mrf.mxu0
    %v817 = vadd.f32 0.0, %v816
    %v818 = vpop.f32.mrf.mxu0
    %v819 = vpop.f32.mrf.mxu0
    %820 = vdwg.mxu0
    %821 = vmatprep.subr.bf16.mxu0 0
    %822 = vmatpush1.bf16.msra.mxu0 0
    %823 = vmatprep.subr.bf16.mxu0 0
    %824 = vmatpush1.bf16.msra.mxu0 0
    %825 = vmatprep.subr.bf16.mxu0 0
    %826 = vmatpush1.bf16.msra.mxu0 0
    %827 = vmatprep.subr.bf16.mxu0 0
    %828 = vmatpush1.bf16.msra.mxu0 0
    %829 = vmatprep.subr.bf16.mxu0 0
    %830 = vmatpush1.bf16.msra.mxu0 0
    %831 = vmatprep.subr.bf16.mxu0 0
    %832 = vmatpush1.bf16.msra.mxu0 0
    %833 = vmatprep.subr.bf16.mxu0 0
    %834 = vmatpush1.bf16.msra.mxu0 0
    %835 = vmatprep.subr.bf16.mxu0 %v778
    %836 = vmatpush1.bf16.msra.mxu0 %v775
    %837 = vmatprep.subr.bf16.mxu0 0
    %838 = vmatpush2.bf16.msra.mxu0 0
    %839 = vmatprep.subr.bf16.mxu0 0
    %840 = vmatpush2.bf16.msra.mxu0 0
    %841 = vmatprep.subr.bf16.mxu0 0
    %842 = vmatpush2.bf16.msra.mxu0 0
    %843 = vmatprep.subr.bf16.mxu0 0
    %844 = vmatpush2.bf16.msra.mxu0 0
    %845 = vmatprep.subr.bf16.mxu0 0
    %846 = vmatpush2.bf16.msra.mxu0 0
    %847 = vmatprep.subr.bf16.mxu0 0
    %848 = vmatpush2.bf16.msra.mxu0 0
    %849 = vmatprep.subr.bf16.mxu0 0
    %850 = vmatpush2.bf16.msra.mxu0 0
    %851 = vmatprep.subr.bf16.mxu0 0
    %852 = vmatpush2.bf16.msra.mxu0 0
    %853 = vmatprep.mubr.bf16.mxu0 0
    %854 = vmatmul.mubr.bf16.gmra.mxu0 %v766
    %v855 = vpop.f32.mrf.mxu0
    %v856 = vadd.f32 0.0, %v855
    %v857 = vpop.f32.mrf.mxu0
    %v858 = vadd.f32 0.0, %v857
    %v859 = vpop.f32.mrf.mxu0
    %v860 = vpop.f32.mrf.mxu0
    %861 = vdwg.mxu0
    %v862 = vadd.f32 %v744, %v815
    %v863 = vadd.f32 %v745, %v817
    %v864 = vadd.f32 %v746, %v856
    %v865 = vadd.f32 %v747, %v858
    %866 = vrot.lane.b32.xlu0 %v39, 72
    %v867 = vpop.permute.xlu0 %866
    %868 = vrot.lane.b32.xlu0 %v50, 95
    %v869 = vpop.permute.xlu0 %868
    %870 = vrot.lane.b32.xlu0 %v51, 95
    %v871 = vpop.permute.xlu0 %870
    %872 = vrot.lane.b32.xlu0 %v52, 95
    %v873 = vpop.permute.xlu0 %872
    %874 = vrot.lane.b32.xlu0 %v53, 95
    %v875 = vpop.permute.xlu0 %874
    %876 = vrot.lane.b32.xlu0 %v54, 95
    %v877 = vpop.permute.xlu0 %876
    %vm878 = vcmask 777216
    %v879 = vsel %vm878, %v869, %v871
    %v880 = vsel %vm878, %v871, %v873
    %v881 = vsel %vm878, %v873, %v875
    %v882 = vsel %vm878, %v875, %v877
    %v884 = vsel %vm70, %v867, 0
    %v887 = vsel %vm74, %v879, 0
    %v890 = vsel %vm74, %v880, 0
    %v893 = vsel %vm74, %v881, 0
    %v896 = vsel %vm74, %v882, 0
    %898 = vmatprep.subr.bf16.mxu0 0
    %899 = vmatpush1.bf16.msra.mxu0 0
    %900 = vmatprep.subr.bf16.mxu0 0
    %901 = vmatpush1.bf16.msra.mxu0 0
    %902 = vmatprep.subr.bf16.mxu0 0
    %903 = vmatpush1.bf16.msra.mxu0 0
    %904 = vmatprep.subr.bf16.mxu0 0
    %905 = vmatpush1.bf16.msra.mxu0 0
    %906 = vmatprep.subr.bf16.mxu0 0
    %907 = vmatpush1.bf16.msra.mxu0 0
    %908 = vmatprep.subr.bf16.mxu0 0
    %909 = vmatpush1.bf16.msra.mxu0 0
    %910 = vmatprep.subr.bf16.mxu0 0
    %911 = vmatpush1.bf16.msra.mxu0 0
    %912 = vmatprep.subr.bf16.mxu0 %v890
    %913 = vmatpush1.bf16.msra.mxu0 %v887
    %914 = vmatprep.subr.bf16.mxu0 0
    %915 = vmatpush2.bf16.msra.mxu0 0
    %916 = vmatprep.subr.bf16.mxu0 0
    %917 = vmatpush2.bf16.msra.mxu0 0
    %918 = vmatprep.subr.bf16.mxu0 0
    %919 = vmatpush2.bf16.msra.mxu0 0
    %920 = vmatprep.subr.bf16.mxu0 0
    %921 = vmatpush2.bf16.msra.mxu0 0
    %922 = vmatprep.subr.bf16.mxu0 0
    %923 = vmatpush2.bf16.msra.mxu0 0
    %924 = vmatprep.subr.bf16.mxu0 0
    %925 = vmatpush2.bf16.msra.mxu0 0
    %926 = vmatprep.subr.bf16.mxu0 0
    %927 = vmatpush2.bf16.msra.mxu0 0
    %928 = vmatprep.subr.bf16.mxu0 0
    %929 = vmatpush2.bf16.msra.mxu0 0
    %930 = vmatprep.mubr.bf16.mxu0 0
    %931 = vmatmul.mubr.bf16.gmra.mxu0 %v884
    %v932 = vpop.f32.mrf.mxu0
    %v933 = vadd.f32 0.0, %v932
    %v934 = vpop.f32.mrf.mxu0
    %v935 = vadd.f32 0.0, %v934
    %v936 = vpop.f32.mrf.mxu0
    %v937 = vpop.f32.mrf.mxu0
    %938 = vdwg.mxu0
    %939 = vmatprep.subr.bf16.mxu0 0
    %940 = vmatpush1.bf16.msra.mxu0 0
    %941 = vmatprep.subr.bf16.mxu0 0
    %942 = vmatpush1.bf16.msra.mxu0 0
    %943 = vmatprep.subr.bf16.mxu0 0
    %944 = vmatpush1.bf16.msra.mxu0 0
    %945 = vmatprep.subr.bf16.mxu0 0
    %946 = vmatpush1.bf16.msra.mxu0 0
    %947 = vmatprep.subr.bf16.mxu0 0
    %948 = vmatpush1.bf16.msra.mxu0 0
    %949 = vmatprep.subr.bf16.mxu0 0
    %950 = vmatpush1.bf16.msra.mxu0 0
    %951 = vmatprep.subr.bf16.mxu0 0
    %952 = vmatpush1.bf16.msra.mxu0 0
    %953 = vmatprep.subr.bf16.mxu0 %v896
    %954 = vmatpush1.bf16.msra.mxu0 %v893
    %955 = vmatprep.subr.bf16.mxu0 0
    %956 = vmatpush2.bf16.msra.mxu0 0
    %957 = vmatprep.subr.bf16.mxu0 0
    %958 = vmatpush2.bf16.msra.mxu0 0
    %959 = vmatprep.subr.bf16.mxu0 0
    %960 = vmatpush2.bf16.msra.mxu0 0
    %961 = vmatprep.subr.bf16.mxu0 0
    %962 = vmatpush2.bf16.msra.mxu0 0
    %963 = vmatprep.subr.bf16.mxu0 0
    %964 = vmatpush2.bf16.msra.mxu0 0
    %965 = vmatprep.subr.bf16.mxu0 0
    %966 = vmatpush2.bf16.msra.mxu0 0
    %967 = vmatprep.subr.bf16.mxu0 0
    %968 = vmatpush2.bf16.msra.mxu0 0
    %969 = vmatprep.subr.bf16.mxu0 0
    %970 = vmatpush2.bf16.msra.mxu0 0
    %971 = vmatprep.mubr.bf16.mxu0 0
    %972 = vmatmul.mubr.bf16.gmra.mxu0 %v884
    %v973 = vpop.f32.mrf.mxu0
    %v974 = vadd.f32 0.0, %v973
    %v975 = vpop.f32.mrf.mxu0
    %v976 = vadd.f32 0.0, %v975
    %v977 = vpop.f32.mrf.mxu0
    %v978 = vpop.f32.mrf.mxu0
    %979 = vdwg.mxu0
    %v980 = vadd.f32 %v862, %v933
    %v981 = vadd.f32 %v863, %v935
    %v982 = vadd.f32 %v864, %v974
    %v983 = vadd.f32 %v865, %v976
    %984 = vrot.lane.b32.xlu0 %v39, 64
    %v985 = vpop.permute.xlu0 %984
    %986 = vrot.lane.b32.xlu0 %v50, 94
    %v987 = vpop.permute.xlu0 %986
    %988 = vrot.lane.b32.xlu0 %v51, 94
    %v989 = vpop.permute.xlu0 %988
    %990 = vrot.lane.b32.xlu0 %v52, 94
    %v991 = vpop.permute.xlu0 %990
    %992 = vrot.lane.b32.xlu0 %v53, 94
    %v993 = vpop.permute.xlu0 %992
    %994 = vrot.lane.b32.xlu0 %v54, 94
    %v995 = vpop.permute.xlu0 %994
    %vm996 = vcmask 769024
    %v997 = vsel %vm996, %v987, %v989
    %v998 = vsel %vm996, %v989, %v991
    %v999 = vsel %vm996, %v991, %v993
    %v1000 = vsel %vm996, %v993, %v995
    %v1002 = vsel %vm70, %v985, 0
    %v1005 = vsel %vm74, %v997, 0
    %v1008 = vsel %vm74, %v998, 0
    %v1011 = vsel %vm74, %v999, 0
    %v1014 = vsel %vm74, %v1000, 0
    %1016 = vmatprep.subr.bf16.mxu0 0
    %1017 = vmatpush1.bf16.msra.mxu0 0
    %1018 = vmatprep.subr.bf16.mxu0 0
    %1019 = vmatpush1.bf16.msra.mxu0 0
    %1020 = vmatprep.subr.bf16.mxu0 0
    %1021 = vmatpush1.bf16.msra.mxu0 0
    %1022 = vmatprep.subr.bf16.mxu0 0
    %1023 = vmatpush1.bf16.msra.mxu0 0
    %1024 = vmatprep.subr.bf16.mxu0 0
    %1025 = vmatpush1.bf16.msra.mxu0 0
    %1026 = vmatprep.subr.bf16.mxu0 0
    %1027 = vmatpush1.bf16.msra.mxu0 0
    %1028 = vmatprep.subr.bf16.mxu0 0
    %1029 = vmatpush1.bf16.msra.mxu0 0
    %1030 = vmatprep.subr.bf16.mxu0 %v1008
    %1031 = vmatpush1.bf16.msra.mxu0 %v1005
    %1032 = vmatprep.subr.bf16.mxu0 0
    %1033 = vmatpush2.bf16.msra.mxu0 0
    %1034 = vmatprep.subr.bf16.mxu0 0
    %1035 = vmatpush2.bf16.msra.mxu0 0
    %1036 = vmatprep.subr.bf16.mxu0 0
    %1037 = vmatpush2.bf16.msra.mxu0 0
    %1038 = vmatprep.subr.bf16.mxu0 0
    %1039 = vmatpush2.bf16.msra.mxu0 0
    %1040 = vmatprep.subr.bf16.mxu0 0
    %1041 = vmatpush2.bf16.msra.mxu0 0
    %1042 = vmatprep.subr.bf16.mxu0 0
    %1043 = vmatpush2.bf16.msra.mxu0 0
    %1044 = vmatprep.subr.bf16.mxu0 0
    %1045 = vmatpush2.bf16.msra.mxu0 0
    %1046 = vmatprep.subr.bf16.mxu0 0
    %1047 = vmatpush2.bf16.msra.mxu0 0
    %1048 = vmatprep.mubr.bf16.mxu0 0
    %1049 = vmatmul.mubr.bf16.gmra.mxu0 %v1002
    %v1050 = vpop.f32.mrf.mxu0
    %v1051 = vadd.f32 0.0, %v1050
    %v1052 = vpop.f32.mrf.mxu0
    %v1053 = vadd.f32 0.0, %v1052
    %v1054 = vpop.f32.mrf.mxu0
    %v1055 = vpop.f32.mrf.mxu0
    %1056 = vdwg.mxu0
    %1057 = vmatprep.subr.bf16.mxu0 0
    %1058 = vmatpush1.bf16.msra.mxu0 0
    %1059 = vmatprep.subr.bf16.mxu0 0
    %1060 = vmatpush1.bf16.msra.mxu0 0
    %1061 = vmatprep.subr.bf16.mxu0 0
    %1062 = vmatpush1.bf16.msra.mxu0 0
    %1063 = vmatprep.subr.bf16.mxu0 0
    %1064 = vmatpush1.bf16.msra.mxu0 0
    %1065 = vmatprep.subr.bf16.mxu0 0
    %1066 = vmatpush1.bf16.msra.mxu0 0
    %1067 = vmatprep.subr.bf16.mxu0 0
    %1068 = vmatpush1.bf16.msra.mxu0 0
    %1069 = vmatprep.subr.bf16.mxu0 0
    %1070 = vmatpush1.bf16.msra.mxu0 0
    %1071 = vmatprep.subr.bf16.mxu0 %v1014
    %1072 = vmatpush1.bf16.msra.mxu0 %v1011
    %1073 = vmatprep.subr.bf16.mxu0 0
    %1074 = vmatpush2.bf16.msra.mxu0 0
    %1075 = vmatprep.subr.bf16.mxu0 0
    %1076 = vmatpush2.bf16.msra.mxu0 0
    %1077 = vmatprep.subr.bf16.mxu0 0
    %1078 = vmatpush2.bf16.msra.mxu0 0
    %1079 = vmatprep.subr.bf16.mxu0 0
    %1080 = vmatpush2.bf16.msra.mxu0 0
    %1081 = vmatprep.subr.bf16.mxu0 0
    %1082 = vmatpush2.bf16.msra.mxu0 0
    %1083 = vmatprep.subr.bf16.mxu0 0
    %1084 = vmatpush2.bf16.msra.mxu0 0
    %1085 = vmatprep.subr.bf16.mxu0 0
    %1086 = vmatpush2.bf16.msra.mxu0 0
    %1087 = vmatprep.subr.bf16.mxu0 0
    %1088 = vmatpush2.bf16.msra.mxu0 0
    %1089 = vmatprep.mubr.bf16.mxu0 0
    %1090 = vmatmul.mubr.bf16.gmra.mxu0 %v1002
    %v1091 = vpop.f32.mrf.mxu0
    %v1092 = vadd.f32 0.0, %v1091
    %v1093 = vpop.f32.mrf.mxu0
    %v1094 = vadd.f32 0.0, %v1093
    %v1095 = vpop.f32.mrf.mxu0
    %v1096 = vpop.f32.mrf.mxu0
    %1097 = vdwg.mxu0
    %v1098 = vadd.f32 %v980, %v1051
    %v1099 = vadd.f32 %v981, %v1053
    %v1100 = vadd.f32 %v982, %v1092
    %v1101 = vadd.f32 %v983, %v1094
    %v1102 = vld [vmem:[%s3] sm:$0xf]
    %v1104 = vlaneseq
    %v1105 = vshrl.u32 %v1104, 7
    %v1106 = vsub.s32 0, %v1105
    %v1107 = vrot.slane %v1102, %v1106
    %v1108 = vlaneseq
    %v1109 = vshrl.u32 %v1108, 7
    %v1110 = vsub.s32 1, %v1109
    %v1111 = vrot.slane %v1102, %v1110
    %v1112 = vlaneseq
    %v1113 = vshrl.u32 %v1112, 7
    %v1114 = vsub.s32 2, %v1113
    %v1115 = vrot.slane %v1102, %v1114
    %v1116 = vlaneseq
    %v1117 = vshrl.u32 %v1116, 7
    %v1118 = vsub.s32 3, %v1117
    %v1119 = vrot.slane %v1102, %v1118
    %v1124 = vmul.f32 %v1098, %v1107
    %v1125 = vmul.f32 %v1099, %v1111
    %v1126 = vmul.f32 %v1100, %v1115
    %v1127 = vmul.f32 %v1101, %v1119
    %v1128 = vadd.f32 %v1124, %v1125
    %v1129 = vadd.f32 %v1128, %v1126
    %v1130 = vadd.f32 %v1129, %v1127
    %1131 = vadd.xlane.f32.xlu0 %v1130
    %v1132 = vpop.xlane.xlu0 %1131
    %v1133 = vmul.f32 %v1132, 0.0025510204
    %v1134 = vsub.f32 %v1098, %v1133
    %v1135 = vsub.f32 %v1099, %v1133
    %v1136 = vsub.f32 %v1100, %v1133
    %v1137 = vsub.f32 %v1101, %v1133
    %v1138 = vmul.f32 %v1134, %v1134
    %v1139 = vmul.f32 %v1135, %v1135
    %v1140 = vmul.f32 %v1136, %v1136
    %v1141 = vmul.f32 %v1137, %v1137
    %v1142 = vmul.f32 %v1138, %v1107
    %v1143 = vmul.f32 %v1139, %v1111
    %v1144 = vmul.f32 %v1140, %v1115
    %v1145 = vmul.f32 %v1141, %v1119
    %v1146 = vadd.f32 %v1142, %v1143
    %v1147 = vadd.f32 %v1146, %v1144
    %v1148 = vadd.f32 %v1147, %v1145
    %1149 = vadd.xlane.f32.xlu0 %v1148
    %v1150 = vpop.xlane.xlu0 %1149
    %v1151 = vmul.f32 %v1150, 0.0025510204
    %v1152 = vld [vmem:[%s2] sm:$0xff]
    %v1153 = vadd.f32 %v1151, 1e-05
    %v1154 = vrsqrt.pop %v1153
    %v1155 = vmul.f32 %v1152, %v1154
    %1157 = vset.pattern.permute.xlu0 0
    %1158 = vperm.xlu0 %1157, %v1155
    %v1159 = vpop.permute.xlu0 %1158
    %v1161 = vmul.f32 %v1134, %v1159
    %v1162 = vmul.f32 %v1135, %v1159
    %v1163 = vmul.f32 %v1136, %v1159
    %v1164 = vmul.f32 %v1137, %v1159
    %1166 = vset.pattern.permute.xlu0 1
    %1167 = vperm.xlu0 %1166, %v1152
    %v1168 = vpop.permute.xlu0 %1167
    %v1170 = vadd.f32 %v1161, %v1168
    %v1171 = vadd.f32 %v1162, %v1168
    %v1172 = vadd.f32 %v1163, %v1168
    %v1173 = vadd.f32 %v1164, %v1168
    %1174 = vst [vmem:[#allocation5] sm:$0xff] %v1170
    %1175 = vst [vmem:[#allocation5 + $0x8] sm:$0xff] %v1171
    %1176 = vst [vmem:[#allocation5 + $0x10] sm:$0xff] %v1172
    %1177 = vst [vmem:[#allocation5 + $0x18] sm:$0xff] %v1173
    // Predicated region
    $region22: #{tpu_custom_call.1} parent=1 // pred_check
      _
    $region23: #{tpu_custom_call.1} parent=1 // pred_check_branch
      %1179 = sbr.rel (0) target = $region25
    $region24: #{tpu_custom_call.1} parent=1 // pred_region
      %s1181 = ssub.s32 512, 512
      %1182 = vsyncadd [#allocation4], %s1181
      %s1184 = sshll.u32 [#allocation5], 4
      %s1185 = int_to_ptr.vmem [resolvable:$true] %s1184
      %1187 = dma.vmem_to_hbm [thread:$0]  %s1185, 512, %s4, [#allocation4]
    $region25: #{tpu_custom_call.1} parent=1 // pred_fallthru
      _
    // Predicated region
    $region26: #{tpu_custom_call.1} parent=1 // pred_check
      _
    $region27: #{tpu_custom_call.1} parent=1 // pred_check_branch
      %1189 = sbr.rel (0) target = $region29
    $region28: #{tpu_custom_call.1} parent=1 // pred_region
      %1190 = dma.done [#allocation4], 512
    $region29: #{tpu_custom_call.1} parent=1 // pred_fallthru
      _
    %1191 = vsyncpa [#allocation3], 1
    %1192 = vsyncpa [#allocation4], 1

</llo_original>
